<compile_context>
chip_gen: v5e
topology: v5e:2x2
jax: 0.10.0
libtpu: 0.0.40
codegen_flags: <defaults>
</compile_context>

<pallas_src>
import functools

import jax
import jax.numpy as jnp
from jax import lax
from jax.experimental import pallas as pl
from jax.experimental.pallas import tpu as pltpu

RMSNORM_EPS = 1e-5
LANE = 128
SUBLANE = 8
UNROLL_MAX_LAYERS = 4          # static unroll threshold for the resident kernel


def _round_up(a: int, b: int) -> int:
    return ((a + b - 1) // b) * b


def _vmem_capacity_bytes() -> int:
    """Per-core VMEM capacity (generation-aware); conservative fallback."""
    try:
        return int(pltpu.get_tpu_info().vmem_capacity_bytes)
    except Exception:
        return 64 << 20        # v7x per-core size; safe lower bound for v5e/v6e


def _bspec(block_shape, index_map, *, single_buffer=False):
    """BlockSpec helper.  Buffered(1) for operands whose index is constant over the
    inner grid axes (halves their VMEM footprint; weights/gamma/bias here)."""
    if single_buffer:
        try:
            return pl.BlockSpec(block_shape, index_map, pipeline_mode=pl.Buffered(1))
        except Exception:      # older jax without pipeline_mode / Buffered
            pass
    return pl.BlockSpec(block_shape, index_map)


# ----------------------------------------------------------------------------
# Plan A ("resident"): all L layers' weights in VMEM, whole chain per token tile
# ----------------------------------------------------------------------------
def _resident_kernel(x_ref, g_ref, w_ref, b_ref, out_ref, *, n_layer, inv_n, unrolled):
    """x:(tm,Np) f32 | g,b:(L,Np) f32 | w:(L,Np,Np) bf16 | out:(tm,Np)."""
    h = x_ref[...]
    res = jnp.zeros_like(h)                    # residual=None on layer 0 -> add nothing

    def layer(l, h, res):
        res = res + h                                             # residual = hidden + residual
        ms = jnp.sum(res * res, axis=-1, keepdims=True) * inv_n   # mean over the TRUE N
        normed = res * lax.rsqrt(ms + RMSNORM_EPS) * g_ref[pl.ds(l, 1), :]
        h = jnp.dot(normed.astype(jnp.bfloat16), w_ref[l],
                    preferred_element_type=jnp.float32) + b_ref[pl.ds(l, 1), :]
        return h, res

    if unrolled:
        for l in range(n_layer):
            h, res = layer(l, h, res)
    else:
        # fori_loop bounds the f32 (tm,Np) live ranges per layer (avoids vreg spills
        # for large L) while still unrolling x2 for scheduler visibility.
        def body(l, carry):
            return layer(l, *carry)
        h, res = lax.fori_loop(0, n_layer, body, (h, res), unroll=2)

    out_ref[...] = (h + res).astype(out_ref.dtype)     # final residual add, fused


# ----------------------------------------------------------------------------
# Plan B ("stream"): layer axis on the grid, weights streamed one layer at a time
# ----------------------------------------------------------------------------
def _stream_kernel(x_ref, g_ref, w_ref, b_ref, out_ref, h_sc, res_sc, *, inv_n):
    """x:(tm,Np) f32 | g,b:(Np,) f32 | w:(Np,Np) bf16 | out:(tm,Np) | scratch f32."""
    l = pl.program_id(2)

    @pl.when(l == 0)
    def _():
        h_sc[...] = x_ref[...]
        res_sc[...] = jnp.zeros_like(res_sc)

    res = res_sc[...] + h_sc[...]                                  # residual = hidden + residual
    ms = jnp.sum(res * res, axis=-1, keepdims=True) * inv_n
    normed = res * lax.rsqrt(ms + RMSNORM_EPS) * g_ref[...]
    h = jnp.dot(normed.astype(jnp.bfloat16), w_ref[...],
                preferred_element_type=jnp.float32) + b_ref[...]
    res_sc[...] = res
    h_sc[...] = h

    @pl.when(l == pl.num_programs(2) - 1)
    def _():
        out_ref[...] = (h + res).astype(out_ref.dtype)             # final residual add


# ----------------------------------------------------------------------------
# VMEM-aware plan / tile selection
# ----------------------------------------------------------------------------
def _choose_plan(T, Np, L, tm_max, force_stream):
    cap = _vmem_capacity_bytes()
    budget = int(cap * 0.80)
    slack = 2 << 20

    tm_top = max(SUBLANE, min(_round_up(T, SUBLANE), _round_up(tm_max, SUBLANE)))
    cands = sorted({t for t in (tm_top, 512, 256, 128, 64, 32, 16, 8)
                    if 0 < t <= tm_top and t % SUBLANE == 0}, reverse=True)

    def resident_bytes(tm):
        w = L * Np * Np * 2                           # weights, single buffer (Buffered(1))
        gb = 2 * _round_up(L, SUBLANE) * Np * 4       # gamma + bias, single buffer
        io = 2 * 2 * tm * Np * 4                      # x + out tiles, double-buffered
        return w + gb + io + slack

    def stream_bytes(tm):
        w = 2 * Np * Np * 2                           # per-layer weights, double-buffered
        gb = 2 * 2 * Np * 4
        io = 2 * 2 * tm * Np * 4
        sc = 2 * tm * Np * 4                          # h / res scratch
        return w + gb + io + sc + slack

    if not force_stream:
        for tm in cands:
            if resident_bytes(tm) <= budget:
                return "resident", tm, resident_bytes(tm), cap
    for tm in cands:
        if stream_bytes(tm) <= budget:
            return "stream", tm, stream_bytes(tm), cap
    return "stream", cands[-1], stream_bytes(cands[-1]), cap


# ----------------------------------------------------------------------------
# ResidualBlockSequence forward (single pallas_call for both directions)
# ----------------------------------------------------------------------------
def residual_block_sequence(x, fwd_params, bwd_params=None, merging="concat",
                            tm_max=512, force_stream=False, out_dtype=None):
    """x: (B, S, N) f32.  params: list of (gamma(1,N), w(N,N), b(1,N)) per layer.

    Returns (B, S, 2N) for bidirectional 'concat', else (B, S, N).
    """
    if merging not in ("concat", "add", "mul"):
        raise ValueError(f"Invalid bidirectional_merging: {merging}")
    B, S, N = x.shape
    T = B * S
    Np = _round_up(N, LANE)                     # lane-dense feature axis
    out_dtype = x.dtype if out_dtype is None else out_dtype

    param_sets = [fwd_params] + ([bwd_params] if bwd_params is not None else [])
    D = len(param_sets)
    L = len(fwd_params)
    if bwd_params is not None:
        assert len(bwd_params) == L

    plan, tm, vmem_needed, vmem_cap = _choose_plan(T, Np, L, tm_max, force_stream)
    T_pad = _round_up(T, tm)

    # ---- stack & zero-pad parameters: (D,L,Np) f32 rows / (D,L,Np,Np) bf16 weights ----
    def pad_row(v):                             # (1,N) -> (Np,)   (no wasted sublanes)
        return jnp.pad(v.reshape(N), (0, Np - N))

    def pad_w(w):                               # (N,N) -> (Np,Np)
        return jnp.pad(w, ((0, Np - N), (0, Np - N)))

    g_st = jnp.stack([jnp.stack([pad_row(g) for g, _, _ in ps]) for ps in param_sets])
    b_st = jnp.stack([jnp.stack([pad_row(b) for _, _, b in ps]) for ps in param_sets])
    w_st = jnp.stack([jnp.stack([pad_w(w) for _, w, _ in ps])
                      for ps in param_sets]).astype(jnp.bfloat16)

    # ---- flatten tokens; backward-direction seq flips cancel for a token-wise mixer ----
    x2d = jnp.pad(x.reshape(T, N).astype(jnp.float32), ((0, T_pad - T), (0, Np - N)))

    inv_n = float(1.0 / N)
    vmem_limit = int(min(int(vmem_cap * 0.90), max(vmem_needed + (8 << 20), 32 << 20)))
    out_shape = jax.ShapeDtypeStruct((T_pad, D * Np), out_dtype)

    out_isz = jnp.dtype(out_dtype).itemsize
    w_passes = D if plan == "resident" else D * (T_pad // tm)
    cost = pl.CostEstimate(
        flops=2 * D * T_pad * L * Np * Np + 8 * D * T_pad * L * Np,
        transcendentals=D * T_pad * L,
        bytes_accessed=(D * T_pad * Np * 4              # x read (once per direction)
                        + D * T_pad * Np * out_isz      # fused-concat output write
                        + w_passes * L * Np * Np * 2    # bf16 weights
                        + 2 * D * L * Np * 4))          # gamma + bias

    if plan == "resident":
        grid = (D, T_pad // tm)
        kernel = functools.partial(_resident_kernel, n_layer=L, inv_n=inv_n,
                                   unrolled=(L <= UNROLL_MAX_LAYERS))
        in_specs = [
            pl.BlockSpec((tm, Np), lambda d, i: (i, 0)),                               # x tile
            _bspec((None, L, Np), lambda d, i: (d, 0, 0), single_buffer=True),         # gammas
            _bspec((None, L, Np, Np), lambda d, i: (d, 0, 0, 0), single_buffer=True),  # weights
            _bspec((None, L, Np), lambda d, i: (d, 0, 0), single_buffer=True),         # biases
        ]
        out_specs = pl.BlockSpec((tm, Np), lambda d, i: (i, d))         # fused 'concat' layout
        scratch_shapes = []
        dim_sem = ("parallel", "parallel")
    else:
        grid = (D, T_pad // tm, L)
        kernel = functools.partial(_stream_kernel, inv_n=inv_n)
        in_specs = [
            pl.BlockSpec((tm, Np), lambda d, i, l: (i, 0)),                     # x tile
            pl.BlockSpec((None, None, Np), lambda d, i, l: (d, l, 0)),          # gamma[l]
            pl.BlockSpec((None, None, Np, Np), lambda d, i, l: (d, l, 0, 0)),   # W[l] (streamed)
            pl.BlockSpec((None, None, Np), lambda d, i, l: (d, l, 0)),          # bias[l]
        ]
        out_specs = pl.BlockSpec((tm, Np), lambda d, i, l: (i, d))
        scratch_shapes = [pltpu.VMEM((tm, Np), jnp.float32),    # h
                          pltpu.VMEM((tm, Np), jnp.float32)]    # res
        dim_sem = ("parallel", "parallel", "arbitrary")

    out2d = pl.pallas_call(
        kernel,
        out_shape=out_shape,
        grid_spec=pltpu.PrefetchScalarGridSpec(
            num_scalar_prefetch=0,
            grid=grid,
            in_specs=in_specs,
            out_specs=out_specs,
            scratch_shapes=scratch_shapes,
        ),
        compiler_params=pltpu.CompilerParams(
            dimension_semantics=dim_sem,
            vmem_limit_bytes=vmem_limit),
        cost_estimate=cost,
    )(x2d, g_st, w_st, b_st)

    # ---- merge directions ('concat' is already fused into the kernel output layout) ----
    if bwd_params is None:
        return out2d[:T, :N].reshape(B, S, N)
    if merging == "concat":
        if N == Np and T == T_pad:
            return out2d.reshape(B, S, 2 * N)       # fully fused; no XLA concat / slice
        fwd = out2d[:T, :N]
        bwd = out2d[:T, Np:Np + N]
        return jnp.concatenate([fwd, bwd], axis=-1).reshape(B, S, 2 * N)
    fwd = out2d[:T, :N]
    bwd = out2d[:T, Np:Np + N]
    merged = fwd + bwd if merging == "add" else fwd * bwd
    return merged.reshape(B, S, N)


# ----------------------------------------------------------------------------
# deterministic parameter init + pure-JAX reference (follows the module literally)
# ----------------------------------------------------------------------------
def init_params(key, n_layer, dim):
    params = []
    for _ in range(n_layer):
        key, k_g, k_w, k_b = jax.random.split(key, 4)
        gamma = 1.0 + 0.02 * jax.random.normal(k_g, (1, dim), jnp.float32)
        w = jax.random.normal(k_w, (dim, dim), jnp.float32) / jnp.sqrt(dim)
        b = 0.01 * jax.random.normal(k_b, (1, dim), jnp.float32)
        params.append((gamma, w, b))
    return key, params


def _ref_chain(x2d, params):
    h, res = x2d, None
    for gamma, w, b in params:
        res = h + res if res is not None else h
        ms = jnp.mean(res * res, axis=-1, keepdims=True)
        normed = res * jax.lax.rsqrt(ms + RMSNORM_EPS) * gamma
        # emulate the kernel's bf16 matmul operands (f32 accumulation)
        nb = normed.astype(jnp.bfloat16).astype(jnp.float32)
        wb = w.astype(jnp.bfloat16).astype(jnp.float32)
        h = jnp.dot(nb, wb) + b
    return h + res


def reference(x, fwd_params, bwd_params=None, merging="concat"):
    B, S, N = x.shape
    out = _ref_chain(x.reshape(B * S, N), fwd_params).reshape(B, S, N)
    if bwd_params is not None:
        xb = jnp.flip(x, axis=1).reshape(B * S, N)       # literal flips, as in PyTorch
        back = jnp.flip(_ref_chain(xb, bwd_params).reshape(B, S, N), axis=1)
        if merging == "concat":
            out = jnp.concatenate([out, back], axis=-1)
        elif merging == "add":
            out = out + back
        elif merging == "mul":
            out = out * back
        else:
            raise ValueError(merging)
    return out


# ----------------------------------------------------------------------------
if __name__ == "__main__":
    B, S, N = 2, 8, 32            # (BATCH, SEQUENCE, N)
    n_layer = 2
    bidirectional = True
    merging = "concat"

    key = jax.random.PRNGKey(0)
    key, x_key = jax.random.split(key)
    x = jax.random.normal(x_key, (B, S, N), jnp.float32)

    key, fwd_params = init_params(key, n_layer, N)
    key, bwd_params = init_params(key, n_layer, N) if bidirectional else (key, None)

    run = jax.jit(residual_block_sequence,
                  static_argnames=("merging", "tm_max", "force_stream", "out_dtype"))
    out = jax.block_until_ready(run(x, fwd_params, bwd_params, merging=merging))

    expected_n = N * 2 if (bidirectional and merging == "concat") else N
    assert out.shape == (B, S, expected_n), out.shape

    ref = reference(x, fwd_params, bwd_params, merging=merging)
    assert jnp.allclose(out, ref, atol=2e-3, rtol=2e-3), "resident-plan mismatch vs reference"

    # also validate the layer-streaming plan (the path big models / v7x take)
    out_s = jax.block_until_ready(
        run(x, fwd_params, bwd_params, merging=merging, force_stream=True))
    assert jnp.allclose(out_s, ref, atol=2e-3, rtol=2e-3), "stream-plan mismatch vs reference"

    print("KERNEL_OK")
</pallas_src>

<mosaic_0001>
module attributes {stable_mosaic.version = 11 : i64} {
  func.func @_resident_kernel(%arg0: i32, %arg1: i32, %arg2: memref<16x128xf32, #tpu.memory_space<vmem>>, %arg3: memref<1x2x128xf32, #tpu.memory_space<vmem>>, %arg4: memref<1x2x128x128xbf16, #tpu.memory_space<vmem>>, %arg5: memref<1x2x128xf32, #tpu.memory_space<vmem>>, %arg6: memref<16x128xf32, #tpu.memory_space<vmem>>) attributes {dimension_semantics = [#tpu.dimension_semantics<parallel>, #tpu.dimension_semantics<parallel>], iteration_bounds = array<i64: 2, 1>, scalar_prefetch = 0 : i64, scratch_operands = 0 : i64, tpu.core_type = #tpu.core_type<tc>, window_params = [{transform_indices = @transform_0, window_bounds = array<i64: 16, 128>}, {pipeline_mode = #tpu.pipeline_mode<synchronous>, transform_indices = @transform_1, window_bounds = array<i64: 1, 2, 128>}, {pipeline_mode = #tpu.pipeline_mode<synchronous>, transform_indices = @transform_2, window_bounds = array<i64: 1, 2, 128, 128>}, {pipeline_mode = #tpu.pipeline_mode<synchronous>, transform_indices = @transform_3, window_bounds = array<i64: 1, 2, 128>}, {transform_indices = @transform_4, window_bounds = array<i64: 16, 128>}]} {
    %c0 = arith.constant 0 : index
    %c0_0 = arith.constant 0 : index
    %0 = vector.load %arg2[%c0, %c0_0] : memref<16x128xf32, #tpu.memory_space<vmem>>, vector<16x128xf32>
    %cst = arith.constant 0.000000e+00 : f32
    %1 = vector.broadcast %cst : f32 to vector<16x128xf32>
    %2 = arith.addf %1, %0 : vector<16x128xf32>
    %3 = arith.mulf %2, %2 : vector<16x128xf32>
    %cst_1 = arith.constant dense<0.000000e+00> : vector<16xf32>
    %4 = vector.multi_reduction <add>, %3, %cst_1 [1] : vector<16x128xf32> to vector<16xf32>
    %5 = vector.shape_cast %4 : vector<16xf32> to vector<16x1xf32>
    %cst_2 = arith.constant 3.125000e-02 : f32
    %6 = vector.broadcast %cst_2 : f32 to vector<16x1xf32>
    %7 = arith.mulf %5, %6 : vector<16x1xf32>
    %cst_3 = arith.constant 9.99999974E-6 : f32
    %8 = vector.broadcast %cst_3 : f32 to vector<16x1xf32>
    %9 = arith.addf %7, %8 : vector<16x1xf32>
    %10 = math.rsqrt %9 : vector<16x1xf32>
    %11 = vector.broadcast %10 : vector<16x1xf32> to vector<16x128xf32>
    %12 = arith.mulf %2, %11 : vector<16x128xf32>
    %c0_4 = arith.constant 0 : index
    %c0_5 = arith.constant 0 : index
    %c0_6 = arith.constant 0 : index
    %13 = vector.load %arg3[%c0_4, %c0_5, %c0_6] : memref<1x2x128xf32, #tpu.memory_space<vmem>>, vector<1x1x128xf32>
    %14 = vector.shape_cast %13 : vector<1x1x128xf32> to vector<1x128xf32>
    %15 = vector.broadcast %14 : vector<1x128xf32> to vector<16x128xf32>
    %16 = arith.mulf %12, %15 : vector<16x128xf32>
    %17 = arith.truncf %16 : vector<16x128xf32> to vector<16x128xbf16>
    %c0_7 = arith.constant 0 : index
    %c0_8 = arith.constant 0 : index
    %c0_9 = arith.constant 0 : index
    %c0_10 = arith.constant 0 : index
    %18 = vector.load %arg4[%c0_7, %c0_8, %c0_9, %c0_10] : memref<1x2x128x128xbf16, #tpu.memory_space<vmem>>, vector<1x1x128x128xbf16>
    %19 = vector.shape_cast %18 : vector<1x1x128x128xbf16> to vector<128x128xbf16>
    %cst_11 = arith.constant dense<0.000000e+00> : vector<16x128xf32>
    %20 = tpu.matmul %17, %19, %cst_11 {dimension_numbers = #tpu.dot_dimension_numbers<[1], [0], [0], [1], [0, 0, 1, 1], [], []>} : vector<16x128xbf16>, vector<128x128xbf16>, vector<16x128xf32> -> vector<16x128xf32>
    %c0_12 = arith.constant 0 : index
    %c0_13 = arith.constant 0 : index
    %c0_14 = arith.constant 0 : index
    %21 = vector.load %arg5[%c0_12, %c0_13, %c0_14] : memref<1x2x128xf32, #tpu.memory_space<vmem>>, vector<1x1x128xf32>
    %22 = vector.shape_cast %21 : vector<1x1x128xf32> to vector<1x128xf32>
    %23 = vector.broadcast %22 : vector<1x128xf32> to vector<16x128xf32>
    %24 = arith.addf %20, %23 : vector<16x128xf32>
    %25 = arith.addf %2, %24 : vector<16x128xf32>
    %26 = arith.mulf %25, %25 : vector<16x128xf32>
    %cst_15 = arith.constant dense<0.000000e+00> : vector<16xf32>
    %27 = vector.multi_reduction <add>, %26, %cst_15 [1] : vector<16x128xf32> to vector<16xf32>
    %28 = vector.shape_cast %27 : vector<16xf32> to vector<16x1xf32>
    %cst_16 = arith.constant 3.125000e-02 : f32
    %29 = vector.broadcast %cst_16 : f32 to vector<16x1xf32>
    %30 = arith.mulf %28, %29 : vector<16x1xf32>
    %cst_17 = arith.constant 9.99999974E-6 : f32
    %31 = vector.broadcast %cst_17 : f32 to vector<16x1xf32>
    %32 = arith.addf %30, %31 : vector<16x1xf32>
    %33 = math.rsqrt %32 : vector<16x1xf32>
    %34 = vector.broadcast %33 : vector<16x1xf32> to vector<16x128xf32>
    %35 = arith.mulf %25, %34 : vector<16x128xf32>
    %c0_18 = arith.constant 0 : index
    %c1 = arith.constant 1 : index
    %c0_19 = arith.constant 0 : index
    %36 = vector.load %arg3[%c0_18, %c1, %c0_19] : memref<1x2x128xf32, #tpu.memory_space<vmem>>, vector<1x1x128xf32>
    %37 = vector.shape_cast %36 : vector<1x1x128xf32> to vector<1x128xf32>
    %38 = vector.broadcast %37 : vector<1x128xf32> to vector<16x128xf32>
    %39 = arith.mulf %35, %38 : vector<16x128xf32>
    %40 = arith.truncf %39 : vector<16x128xf32> to vector<16x128xbf16>
    %c0_20 = arith.constant 0 : index
    %c1_21 = arith.constant 1 : index
    %c0_22 = arith.constant 0 : index
    %c0_23 = arith.constant 0 : index
    %41 = vector.load %arg4[%c0_20, %c1_21, %c0_22, %c0_23] : memref<1x2x128x128xbf16, #tpu.memory_space<vmem>>, vector<1x1x128x128xbf16>
    %42 = vector.shape_cast %41 : vector<1x1x128x128xbf16> to vector<128x128xbf16>
    %cst_24 = arith.constant dense<0.000000e+00> : vector<16x128xf32>
    %43 = tpu.matmul %40, %42, %cst_24 {dimension_numbers = #tpu.dot_dimension_numbers<[1], [0], [0], [1], [0, 0, 1, 1], [], []>} : vector<16x128xbf16>, vector<128x128xbf16>, vector<16x128xf32> -> vector<16x128xf32>
    %c0_25 = arith.constant 0 : index
    %c1_26 = arith.constant 1 : index
    %c0_27 = arith.constant 0 : index
    %44 = vector.load %arg5[%c0_25, %c1_26, %c0_27] : memref<1x2x128xf32, #tpu.memory_space<vmem>>, vector<1x1x128xf32>
    %45 = vector.shape_cast %44 : vector<1x1x128xf32> to vector<1x128xf32>
    %46 = vector.broadcast %45 : vector<1x128xf32> to vector<16x128xf32>
    %47 = arith.addf %43, %46 : vector<16x128xf32>
    %48 = arith.addf %47, %25 : vector<16x128xf32>
    %c0_28 = arith.constant 0 : index
    %c0_29 = arith.constant 0 : index
    %49 = vector.load %arg6[%c0_28, %c0_29] : memref<16x128xf32, #tpu.memory_space<vmem>>, vector<16x128xf32>
    tpu.vector_store %arg6[%c0_28, %c0_29], %48 {strides = array<i32>} : memref<16x128xf32, #tpu.memory_space<vmem>>, vector<16x128xf32>,
    return
  }
  func.func @transform_0(%arg0: i32, %arg1: i32) -> (i32, i32) {
    %c0_i32 = arith.constant 0 : i32
    %c0_i32_0 = arith.constant 0 : i32
    return %arg1, %c0_i32 : i32, i32
  }
  func.func @transform_1(%arg0: i32, %arg1: i32) -> (i32, i32, i32) {
    %c0_i32 = arith.constant 0 : i32
    %c0_i32_0 = arith.constant 0 : i32
    %c0_i32_1 = arith.constant 0 : i32
    return %arg0, %c0_i32, %c0_i32_0 : i32, i32, i32
  }
  func.func @transform_2(%arg0: i32, %arg1: i32) -> (i32, i32, i32, i32) {
    %c0_i32 = arith.constant 0 : i32
    %c0_i32_0 = arith.constant 0 : i32
    %c0_i32_1 = arith.constant 0 : i32
    %c0_i32_2 = arith.constant 0 : i32
    return %arg0, %c0_i32, %c0_i32_0, %c0_i32_1 : i32, i32, i32, i32
  }
  func.func @transform_3(%arg0: i32, %arg1: i32) -> (i32, i32, i32) {
    %c0_i32 = arith.constant 0 : i32
    %c0_i32_0 = arith.constant 0 : i32
    %c0_i32_1 = arith.constant 0 : i32
    return %arg0, %c0_i32, %c0_i32_0 : i32, i32, i32
  }
  func.func @transform_4(%arg0: i32, %arg1: i32) -> (i32, i32) {
    %c0_i32 = arith.constant 0 : i32
    return %arg1, %arg0 : i32, i32
  }
}

</mosaic_0001>

<llo_original>
// kernel: residual_block_sequence.1
$region0: #{residual_block_sequence.1}
  #allocation0 [shape = 'u32[]', space=smem, size = 0x4, offset = 0x4, fixed_abs, tag = 'smem constant byte address 0x4 - core index']
  #allocation1 [shape = 'u32[72,128]{1,0:T(1,128)}', space=vmem, size = 0x9000, scoped, tag = 'internal scratch']
  %s0 = inlined_call_operand.vmem [shape: f32[16,128], index: 0, kind: input, shape index: {}]
  %s1 = inlined_call_operand.vmem [shape: f32[2,2,128], index: 1, kind: input, shape index: {}]
  %s2 = inlined_call_operand.vmem [shape: bf16[2,2,128,128], index: 2, kind: input, shape index: {}]
  %s3 = inlined_call_operand.vmem [shape: f32[2,2,128], index: 3, kind: input, shape index: {}]
  %s4 = inlined_call_operand.vmem [shape: f32[16,256], index: 4, kind: output, shape index: {}]
  %s5 = sld [smem:[#allocation0]]
  $region83: #{residual_block_sequence.1} parent=0
    _
  %s7 = ssub.s32 1, %s5
  %s8 = scalar_select 0, %s7, %s5
  $region1: #{residual_block_sequence.1} parent=0
    #allocation2 [shape = 'u8[16384]{0}', space=vmem, size = 0x4000, scoped, tag = 'output window, operand 0']
    loop: start=0, step=1, limit=4
    $region2: #{residual_block_sequence.1} parent=1 // loop_pre_header
      _
    $region3: #{residual_block_sequence.1} parent=1 // loop_header
      %s10 = sphi 0, %s14
      %p11 = scmp.ge.s32.totalorder %s10, 4
      %s17 = sphi 0, %s29
      %s18 = sphi 0, %s25
      %s19 = sphi 0, %s17
      %s20 = sphi 0, %s18
      %s21 = sphi 0, %s19
      %s22 = sphi 0, %s20
      %s32 = sphi 0, %s34
      %s35 = sphi 0, %s32
      %s36 = sphi 0, %s35
      %s52 = sphi 0, %s36
      %s58 = sphi 0, %s60
      %s61 = sphi 0, %s58
      %s62 = sphi 0, %s61
      %s78 = sphi 0, %s62
      %s84 = sphi 0, %s86
      %s87 = sphi 0, %s84
      %s88 = sphi 0, %s87
      %s104 = sphi 0, %s88
      %s110 = sphi 0, %s112
      %s113 = sphi 0, %s110
      %s114 = sphi 0, %s113
      %s130 = sphi 0, %s114
      %s138 = sphi 0, %s140
      %s141 = sphi 0, %s138
      %s142 = sphi 0, %s141
      %s158 = sphi 0, %s142
    $region4: #{residual_block_sequence.1} parent=1 // loop_header_branch
      %13 = sbr.rel (%p11) target = $region8
    $region5: #{residual_block_sequence.1} parent=1 // loop_body
      %s15 = ssub.s32 %s10, 1
      %s16 = ssub.s32 %s10, 2
      %s23 = sadd.s32 1, %s18
      %p24 = scmp.ge.s32.totalorder %s23, 1
      %s25 = scalar_select %p24, 0, %s23
      %s26 = sadd.s32 1, %s17
      %s27 = scalar_select %p24, %s26, %s17
      %p28 = scmp.ge.s32.totalorder %s27, 2
      %s29 = scalar_select %p28, 0, %s27
      %s30 = ssub.s32 %s18, %s25
      %p31 = scmp.eq.s32.totalorder %s30, 0
      %s33 = sadd.s32 %s32, 1
      %s34 = scalar_select %p31, %s32, %s33
      %p37 = pneg %p31
      %p38 = scmp.eq.s32.totalorder %s10, 1
      %p39 = por %p37, %p38
      %p40 = scmp.ne.s32.totalorder %s32, %s35
      %p41 = scmp.eq.s32.totalorder %s10, 0
      %p42 = por %p40, %p41
      %p43 = scmp.ne.s32.totalorder %s32, %s35
      %p44 = scmp.eq.s32.totalorder %s15, 1
      %p45 = por %p43, %p44
      %p46 = scmp.ne.s32.totalorder %s35, %s36
      %p47 = scmp.eq.s32.totalorder %s15, 0
      %p48 = por %p46, %p47
      %p49 = scmp.ne.s32.totalorder %s35, %s36
      %p50 = scmp.eq.s32.totalorder %s16, 1
      %p51 = por %p49, %p50
      %p53 = scmp.ne.s32.totalorder %s36, %s52
      %p54 = scmp.eq.s32.totalorder %s16, 0
      %p55 = por %p53, %p54
      %s56 = ssub.s32 %s17, %s29
      %p57 = scmp.eq.s32.totalorder %s56, 0
      %s59 = sadd.s32 %s58, 1
      %s60 = scalar_select %p57, %s58, %s59
      %p63 = pneg %p57
      %p64 = scmp.eq.s32.totalorder %s10, 1
      %p65 = por %p63, %p64
      %p66 = scmp.ne.s32.totalorder %s58, %s61
      %p67 = scmp.eq.s32.totalorder %s10, 0
      %p68 = por %p66, %p67
      %p69 = scmp.ne.s32.totalorder %s58, %s61
      %p70 = scmp.eq.s32.totalorder %s15, 1
      %p71 = por %p69, %p70
      %p72 = scmp.ne.s32.totalorder %s61, %s62
      %p73 = scmp.eq.s32.totalorder %s15, 0
      %p74 = por %p72, %p73
      %p75 = scmp.ne.s32.totalorder %s61, %s62
      %p76 = scmp.eq.s32.totalorder %s16, 1
      %p77 = por %p75, %p76
      %p79 = scmp.ne.s32.totalorder %s62, %s78
      %p80 = scmp.eq.s32.totalorder %s16, 0
      %p81 = por %p79, %p80
      %s82 = ssub.s32 %s17, %s29
      %p83 = scmp.eq.s32.totalorder %s82, 0
      %s85 = sadd.s32 %s84, 1
      %s86 = scalar_select %p83, %s84, %s85
      %p89 = pneg %p83
      %p90 = scmp.eq.s32.totalorder %s10, 1
      %p91 = por %p89, %p90
      %p92 = scmp.ne.s32.totalorder %s84, %s87
      %p93 = scmp.eq.s32.totalorder %s10, 0
      %p94 = por %p92, %p93
      %p95 = scmp.ne.s32.totalorder %s84, %s87
      %p96 = scmp.eq.s32.totalorder %s15, 1
      %p97 = por %p95, %p96
      %p98 = scmp.ne.s32.totalorder %s87, %s88
      %p99 = scmp.eq.s32.totalorder %s15, 0
      %p100 = por %p98, %p99
      %p101 = scmp.ne.s32.totalorder %s87, %s88
      %p102 = scmp.eq.s32.totalorder %s16, 1
      %p103 = por %p101, %p102
      %p105 = scmp.ne.s32.totalorder %s88, %s104
      %p106 = scmp.eq.s32.totalorder %s16, 0
      %p107 = por %p105, %p106
      %s108 = ssub.s32 %s17, %s29
      %p109 = scmp.eq.s32.totalorder %s108, 0
      %s111 = sadd.s32 %s110, 1
      %s112 = scalar_select %p109, %s110, %s111
      %p115 = pneg %p109
      %p116 = scmp.eq.s32.totalorder %s10, 1
      %p117 = por %p115, %p116
      %p118 = scmp.ne.s32.totalorder %s110, %s113
      %p119 = scmp.eq.s32.totalorder %s10, 0
      %p120 = por %p118, %p119
      %p121 = scmp.ne.s32.totalorder %s110, %s113
      %p122 = scmp.eq.s32.totalorder %s15, 1
      %p123 = por %p121, %p122
      %p124 = scmp.ne.s32.totalorder %s113, %s114
      %p125 = scmp.eq.s32.totalorder %s15, 0
      %p126 = por %p124, %p125
      %p127 = scmp.ne.s32.totalorder %s113, %s114
      %p128 = scmp.eq.s32.totalorder %s16, 1
      %p129 = por %p127, %p128
      %p131 = scmp.ne.s32.totalorder %s114, %s130
      %p132 = scmp.eq.s32.totalorder %s16, 0
      %p133 = por %p131, %p132
      %s134 = ssub.s32 %s18, %s25
      %s135 = ssub.s32 %s17, %s29
      %s136 = sor.u32 %s134, %s135
      %p137 = scmp.eq.s32.totalorder %s136, 0
      %s139 = sadd.s32 %s138, 1
      %s140 = scalar_select %p137, %s138, %s139
      %p143 = pneg %p137
      %p144 = scmp.eq.s32.totalorder %s10, 1
      %p145 = por %p143, %p144
      %p146 = scmp.ne.s32.totalorder %s138, %s141
      %p147 = scmp.eq.s32.totalorder %s10, 0
      %p148 = por %p146, %p147
      %p149 = scmp.ne.s32.totalorder %s138, %s141
      %p150 = scmp.eq.s32.totalorder %s15, 1
      %p151 = por %p149, %p150
      %p152 = scmp.ne.s32.totalorder %s141, %s142
      %p153 = scmp.eq.s32.totalorder %s15, 0
      %p154 = por %p152, %p153
      %p155 = scmp.ne.s32.totalorder %s141, %s142
      %p156 = scmp.eq.s32.totalorder %s16, 1
      %p157 = por %p155, %p156
      %p159 = scmp.ne.s32.totalorder %s142, %s158
      %p160 = scmp.eq.s32.totalorder %s16, 0
      %p161 = por %p159, %p160
      %p162 = scmp.le.s32.totalorder 1, %s10
      %p163 = scmp.lt.s32.totalorder %s10, 3
      %p164 = pnand %p162, %p163
      %p165 = pneg %p164
      // Predicated region
      $region9: #{residual_block_sequence.1} parent=5 // pred_check
        _
      $region10: #{residual_block_sequence.1} parent=5 // pred_check_branch
        %167 = sbr.rel (%p164) target = $region12
      $region11: #{residual_block_sequence.1} parent=5 // pred_region
        %s168 = ssub.s32 %s10, 1
        // Predicated region
        $region13: #{residual_block_sequence.1} parent=11 // pred_check
          %p169 = pneg %p48
        $region14: #{residual_block_sequence.1} parent=11 // pred_check_branch
          %171 = sbr.rel (%p169) target = $region16
        $region15: #{residual_block_sequence.1} parent=11 // pred_region
          %s172 = smul.u32 2, %s20
          %p173 = scmp.lt.s32.totalorder %s172, 1
          %s174 = scalar_select %p173, %s172, 1
          %s175 = smul.addr %s174, 8
          %s176 = scalar_lea.vmem %s0, %s175
          %s177 = smul.u32 2, %s20
        $region16: #{residual_block_sequence.1} parent=11 // pred_fallthru
          _
        // Predicated region
        $region17: #{residual_block_sequence.1} parent=11 // pred_check
          %p178 = pneg %p74
        $region18: #{residual_block_sequence.1} parent=11 // pred_check_branch
          %180 = sbr.rel (%p178) target = $region20
        $region19: #{residual_block_sequence.1} parent=11 // pred_region
          %p181 = scmp.lt.s32.totalorder %s19, 1
          %s182 = scalar_select %p181, %s19, 1
          %s183 = smul.addr %s182, 2
          %s184 = scalar_lea.vmem %s1, %s183
        $region20: #{residual_block_sequence.1} parent=11 // pred_fallthru
          _
        // Predicated region
        $region21: #{residual_block_sequence.1} parent=11 // pred_check
          %p185 = pneg %p100
        $region22: #{residual_block_sequence.1} parent=11 // pred_check_branch
          %187 = sbr.rel (%p185) target = $region24
        $region23: #{residual_block_sequence.1} parent=11 // pred_region
          %p188 = scmp.lt.s32.totalorder %s19, 1
          %s189 = scalar_select %p188, %s19, 1
          %s190 = smul.addr %s189, 32
          %s191 = smul.addr %s190, 4
          %s192 = scalar_lea.vmem %s2, %s191
        $region24: #{residual_block_sequence.1} parent=11 // pred_fallthru
          _
        // Predicated region
        $region25: #{residual_block_sequence.1} parent=11 // pred_check
          %p193 = pneg %p126
        $region26: #{residual_block_sequence.1} parent=11 // pred_check_branch
          %195 = sbr.rel (%p193) target = $region28
        $region27: #{residual_block_sequence.1} parent=11 // pred_region
          %p196 = scmp.lt.s32.totalorder %s19, 1
          %s197 = scalar_select %p196, %s19, 1
          %s198 = smul.addr %s197, 2
          %s199 = scalar_lea.vmem %s3, %s198
        $region28: #{residual_block_sequence.1} parent=11 // pred_fallthru
          _
      $region12: #{residual_block_sequence.1} parent=5 // pred_fallthru
        _
      %p200 = scmp.lt.s32.totalorder %s10, 2
      // Predicated region
      $region29: #{residual_block_sequence.1} parent=5 // pred_check
        %p201 = pneg %p200
      $region30: #{residual_block_sequence.1} parent=5 // pred_check_branch
        %203 = sbr.rel (%p201) target = $region32
      $region31: #{residual_block_sequence.1} parent=5 // pred_region
        _
      $region32: #{residual_block_sequence.1} parent=5 // pred_fallthru
        _
      %p204 = scmp.le.s32.totalorder 1, %s10
      %p205 = scmp.lt.s32.totalorder %s10, 3
      %p206 = pnand %p204, %p205
      %p207 = pneg %p206
      // Predicated region
      $region33: #{residual_block_sequence.1} parent=5 // pred_check
        _
      $region34: #{residual_block_sequence.1} parent=5 // pred_check_branch
        %209 = sbr.rel (%p206) target = $region36
      $region35: #{residual_block_sequence.1} parent=5 // pred_region
        %s210 = ssub.s32 %s10, 1
        %s211 = smul.u32 2, %s20
        %p212 = scmp.lt.s32.totalorder %s211, 1
        %s213 = scalar_select %p212, %s211, 1
        %s214 = smul.addr %s213, 8
        %s215 = scalar_lea.vmem %s0, %s214
        %p216 = pneg %p48
        %p217 = pneg %p45
        %p218 = scmp.lt.s32.totalorder %s19, 1
        %s219 = scalar_select %p218, %s19, 1
        %s220 = smul.addr %s219, 2
        %s221 = scalar_lea.vmem %s1, %s220
        %p222 = pneg %p74
        %p223 = pneg %p71
        %p224 = scmp.lt.s32.totalorder %s19, 1
        %s225 = scalar_select %p224, %s19, 1
        %s226 = smul.addr %s225, 32
        %s227 = smul.addr %s226, 4
        %s228 = scalar_lea.vmem %s2, %s227
        %p229 = pneg %p100
        %p230 = pneg %p97
        %p231 = scmp.lt.s32.totalorder %s19, 1
        %s232 = scalar_select %p231, %s19, 1
        %s233 = smul.addr %s232, 2
        %s234 = scalar_lea.vmem %s3, %s233
        %p235 = pneg %p126
        %p236 = pneg %p123
        %p237 = pneg %p154
        %p238 = pneg %p151
        %s239 = sand.u32 %s141, 1
        %s240 = sand.u32 %s141, 1
        %s241 = smul.addr %s240, 16
        %s242 = scalar_lea.vmem [#allocation2], %s241
        %s243 = smul.u32 2, %s20
        %p244 = scmp.lt.s32.totalorder %s243, 1
        %s245 = scalar_select %p244, %s243, 1
        %s246 = smul.addr %s245, 8
        %s247 = scalar_lea.vmem %s0, %s246
        %s248 = smul.u32 2, %s20
        %p249 = scmp.lt.s32.totalorder %s19, 1
        %s250 = scalar_select %p249, %s19, 1
        %s251 = smul.addr %s250, 2
        %s252 = scalar_lea.vmem %s1, %s251
        %p253 = scmp.lt.s32.totalorder %s19, 1
        %s254 = scalar_select %p253, %s19, 1
        %s255 = smul.addr %s254, 32
        %s256 = smul.addr %s255, 4
        %s257 = scalar_lea.vmem %s2, %s256
        %p258 = scmp.lt.s32.totalorder %s19, 1
        %s259 = scalar_select %p258, %s19, 1
        %s260 = smul.addr %s259, 2
        %s261 = scalar_lea.vmem %s3, %s260
        %s262 = smul.u32 2, %s20
        %v263 = vld [vmem:[%s247] sm:$0xff]
        %v264 = vld [vmem:[%s247 + $0x8] sm:$0xff]
        %v265 = vadd.f32 %v263, 0.0
        %v266 = vadd.f32 %v264, 0.0
        %v267 = vmul.f32 %v265, %v265
        %v268 = vmul.f32 %v266, %v266
        %269 = vadd.xlane.f32.xlu0 %v267
        %v270 = vpop.xlane.xlu0 %269
        %271 = vadd.xlane.f32.xlu0 %v268
        %v272 = vpop.xlane.xlu0 %271
        %v273 = vmul.f32 %v270, 0.03125
        %v274 = vmul.f32 %v272, 0.03125
        %v275 = vadd.f32 %v273, 1e-05
        %v276 = vadd.f32 %v274, 1e-05
        %v277 = vrsqrt.pop %v275
        %v278 = vmul.f32 %v277, %v275
        %v279 = vmul.f32 %v278, %v277
        %v280 = vmul.f32 0.5, %v279
        %v281 = vsub.f32 1.5, %v280
        %v282 = vmul.f32 %v277, %v281
        %vm283 = vweird.f32 %v275
        %vm284 = vweird.f32 %v277
        %vm285 = vmor %vm283, %vm284
        %v286 = vsel %vm285, %v277, %v282
        %v287 = vrsqrt.pop %v276
        %v288 = vmul.f32 %v287, %v276
        %v289 = vmul.f32 %v288, %v287
        %v290 = vmul.f32 0.5, %v289
        %v291 = vsub.f32 1.5, %v290
        %v292 = vmul.f32 %v287, %v291
        %vm293 = vweird.f32 %v276
        %vm294 = vweird.f32 %v287
        %vm295 = vmor %vm293, %vm294
        %v296 = vsel %vm295, %v287, %v292
        %v297 = vmul.f32 %v265, %v286
        %v298 = vmul.f32 %v266, %v296
        %v299 = vld [vmem:[%s252] sm:$0x1]
        %v300 = vperm.slane %v299, 0
        %v301 = vmul.f32 %v297, %v300
        %v302 = vmul.f32 %v298, %v300
        %v303 = vpack.c.bf16 %v302, %v301
        %v304 = vld [vmem:[%s257] sm:$0xf]
        %v305 = vld [vmem:[%s257 + $0x4] sm:$0xf]
        %v306 = vld [vmem:[%s257 + $0x8] sm:$0xf]
        %v307 = vld [vmem:[%s257 + $0xc] sm:$0xf]
        %v308 = vld [vmem:[%s257 + $0x10] sm:$0xf]
        %v309 = vld [vmem:[%s257 + $0x14] sm:$0xf]
        %v310 = vld [vmem:[%s257 + $0x18] sm:$0xf]
        %v311 = vld [vmem:[%s257 + $0x1c] sm:$0xf]
        %v312 = vld [vmem:[%s257 + $0x20] sm:$0xf]
        %v313 = vld [vmem:[%s257 + $0x24] sm:$0xf]
        %v314 = vld [vmem:[%s257 + $0x28] sm:$0xf]
        %v315 = vld [vmem:[%s257 + $0x2c] sm:$0xf]
        %v316 = vld [vmem:[%s257 + $0x30] sm:$0xf]
        %v317 = vld [vmem:[%s257 + $0x34] sm:$0xf]
        %v318 = vld [vmem:[%s257 + $0x38] sm:$0xf]
        %v319 = vld [vmem:[%s257 + $0x3c] sm:$0xf]
        %v320 = vld [vmem:[%s261] sm:$0x1]
        %v321 = vperm.slane %v320, 0
        %v338 = vunpack.c.l.b16 %v304
        %v339 = vunpack.c.l.b16 %v305
        %v340 = vunpack.c.l.b16 %v306
        %v341 = vunpack.c.l.b16 %v307
        %v342 = vunpack.c.l.b16 %v308
        %v343 = vunpack.c.l.b16 %v309
        %v344 = vunpack.c.l.b16 %v310
        %v345 = vunpack.c.l.b16 %v311
        %v346 = vunpack.c.l.b16 %v312
        %v347 = vunpack.c.l.b16 %v313
        %v348 = vunpack.c.l.b16 %v314
        %v349 = vunpack.c.l.b16 %v315
        %v350 = vunpack.c.l.b16 %v316
        %v351 = vunpack.c.l.b16 %v317
        %v352 = vunpack.c.l.b16 %v318
        %v353 = vunpack.c.l.b16 %v319
        %v354 = vpack.c.b16 %v339, %v338
        %v355 = vpack.c.b16 %v341, %v340
        %v356 = vpack.c.b16 %v343, %v342
        %v357 = vpack.c.b16 %v345, %v344
        %v358 = vpack.c.b16 %v347, %v346
        %v359 = vpack.c.b16 %v349, %v348
        %v360 = vpack.c.b16 %v351, %v350
        %v361 = vpack.c.b16 %v353, %v352
        %370 = vmatpush.bf16.msra.mxu0 %v361
        %371 = vmatpush.bf16.msra.mxu0 %v360
        %372 = vmatpush.bf16.msra.mxu0 %v359
        %373 = vmatpush.bf16.msra.mxu0 %v358
        %374 = vmatpush.bf16.msra.mxu0 %v357
        %375 = vmatpush.bf16.msra.mxu0 %v356
        %376 = vmatpush.bf16.msra.mxu0 %v355
        %377 = vmatpush.bf16.msra.mxu0 %v354
        %378 = vmatmul.bf16.gmra.mxu0 %v303
        %v379 = vpop.f32.mrf.mxu0
        %v380 = vadd.f32 %v321, %v379
        %v381 = vpop.f32.mrf.mxu0
        %v382 = vadd.f32 %v321, %v381
        %383 = vdwg.mxu0
        %v384 = vadd.f32 %v265, %v380
        %v385 = vadd.f32 %v266, %v382
        %v386 = vmul.f32 %v384, %v384
        %v387 = vmul.f32 %v385, %v385
        %388 = vadd.xlane.f32.xlu0 %v386
        %v389 = vpop.xlane.xlu0 %388
        %390 = vadd.xlane.f32.xlu0 %v387
        %v391 = vpop.xlane.xlu0 %390
        %v392 = vmul.f32 %v389, 0.03125
        %v393 = vmul.f32 %v391, 0.03125
        %v394 = vadd.f32 %v392, 1e-05
        %v395 = vadd.f32 %v393, 1e-05
        %v396 = vrsqrt.pop %v394
        %v397 = vmul.f32 %v396, %v394
        %v398 = vmul.f32 %v397, %v396
        %v399 = vmul.f32 0.5, %v398
        %v400 = vsub.f32 1.5, %v399
        %v401 = vmul.f32 %v396, %v400
        %vm402 = vweird.f32 %v394
        %vm403 = vweird.f32 %v396
        %vm404 = vmor %vm402, %vm403
        %v405 = vsel %vm404, %v396, %v401
        %v406 = vrsqrt.pop %v395
        %v407 = vmul.f32 %v406, %v395
        %v408 = vmul.f32 %v407, %v406
        %v409 = vmul.f32 0.5, %v408
        %v410 = vsub.f32 1.5, %v409
        %v411 = vmul.f32 %v406, %v410
        %vm412 = vweird.f32 %v395
        %vm413 = vweird.f32 %v406
        %vm414 = vmor %vm412, %vm413
        %v415 = vsel %vm414, %v406, %v411
        %v416 = vmul.f32 %v384, %v405
        %v417 = vmul.f32 %v385, %v415
        %v418 = vld [vmem:[%s252 + $0x1] sm:$0x1]
        %v419 = vperm.slane %v418, 0
        %v420 = vmul.f32 %v416, %v419
        %v421 = vmul.f32 %v417, %v419
        %v422 = vpack.c.bf16 %v421, %v420
        %s423 = scalar_lea.vmem %s257, 64
        %v424 = vld [vmem:[%s423] sm:$0xf]
        %v425 = vld [vmem:[%s423 + $0x4] sm:$0xf]
        %v426 = vld [vmem:[%s423 + $0x8] sm:$0xf]
        %v427 = vld [vmem:[%s423 + $0xc] sm:$0xf]
        %v428 = vld [vmem:[%s423 + $0x10] sm:$0xf]
        %v429 = vld [vmem:[%s423 + $0x14] sm:$0xf]
        %v430 = vld [vmem:[%s423 + $0x18] sm:$0xf]
        %v431 = vld [vmem:[%s423 + $0x1c] sm:$0xf]
        %v432 = vld [vmem:[%s423 + $0x20] sm:$0xf]
        %v433 = vld [vmem:[%s423 + $0x24] sm:$0xf]
        %v434 = vld [vmem:[%s423 + $0x28] sm:$0xf]
        %v435 = vld [vmem:[%s423 + $0x2c] sm:$0xf]
        %v436 = vld [vmem:[%s423 + $0x30] sm:$0xf]
        %v437 = vld [vmem:[%s423 + $0x34] sm:$0xf]
        %v438 = vld [vmem:[%s423 + $0x38] sm:$0xf]
        %v439 = vld [vmem:[%s423 + $0x3c] sm:$0xf]
        %v440 = vld [vmem:[%s261 + $0x1] sm:$0x1]
        %v441 = vperm.slane %v440, 0
        %v458 = vunpack.c.l.b16 %v424
        %v459 = vunpack.c.l.b16 %v425
        %v460 = vunpack.c.l.b16 %v426
        %v461 = vunpack.c.l.b16 %v427
        %v462 = vunpack.c.l.b16 %v428
        %v463 = vunpack.c.l.b16 %v429
        %v464 = vunpack.c.l.b16 %v430
        %v465 = vunpack.c.l.b16 %v431
        %v466 = vunpack.c.l.b16 %v432
        %v467 = vunpack.c.l.b16 %v433
        %v468 = vunpack.c.l.b16 %v434
        %v469 = vunpack.c.l.b16 %v435
        %v470 = vunpack.c.l.b16 %v436
        %v471 = vunpack.c.l.b16 %v437
        %v472 = vunpack.c.l.b16 %v438
        %v473 = vunpack.c.l.b16 %v439
        %v474 = vpack.c.b16 %v459, %v458
        %v475 = vpack.c.b16 %v461, %v460
        %v476 = vpack.c.b16 %v463, %v462
        %v477 = vpack.c.b16 %v465, %v464
        %v478 = vpack.c.b16 %v467, %v466
        %v479 = vpack.c.b16 %v469, %v468
        %v480 = vpack.c.b16 %v471, %v470
        %v481 = vpack.c.b16 %v473, %v472
        %490 = vmatpush.bf16.msra.mxu0 %v481
        %491 = vmatpush.bf16.msra.mxu0 %v480
        %492 = vmatpush.bf16.msra.mxu0 %v479
        %493 = vmatpush.bf16.msra.mxu0 %v478
        %494 = vmatpush.bf16.msra.mxu0 %v477
        %495 = vmatpush.bf16.msra.mxu0 %v476
        %496 = vmatpush.bf16.msra.mxu0 %v475
        %497 = vmatpush.bf16.msra.mxu0 %v474
        %498 = vmatmul.bf16.gmra.mxu0 %v422
        %v499 = vpop.f32.mrf.mxu0
        %v500 = vadd.f32 %v441, %v499
        %v501 = vpop.f32.mrf.mxu0
        %v502 = vadd.f32 %v441, %v501
        %503 = vdwg.mxu0
        %v504 = vadd.f32 %v500, %v384
        %v505 = vadd.f32 %v502, %v385
        %506 = vst [vmem:[%s242] sm:$0xff] %v504
        %507 = vst [vmem:[%s242 + $0x8] sm:$0xff] %v505
        %s508 = sand.u32 %s141, 1
        %s509 = sand.u32 %s141, 1
        %s510 = smul.addr %s509, 16
        %s511 = scalar_lea.vmem [#allocation2], %s510
        // Predicated region
        $region37: #{residual_block_sequence.1} parent=35 // pred_check
          %p512 = pneg %p151
        $region38: #{residual_block_sequence.1} parent=35 // pred_check_branch
          %514 = sbr.rel (%p512) target = $region40
        $region39: #{residual_block_sequence.1} parent=35 // pred_region
          %s515 = smul.u32 2, %s20
          %s516 = smul.addr %s515, 2
          %s517 = sadd.s32 %s19, %s516
          %s518 = smul.addr %s517, 8
          %s519 = scalar_lea.vmem %s4, %s518
          // Predicated region
          $region41: #{residual_block_sequence.1} parent=39 // pred_check
            _
          $region42: #{residual_block_sequence.1} parent=39 // pred_check_branch
            %521 = sbr.rel (0) target = $region44
          $region43: #{residual_block_sequence.1} parent=39 // pred_region
            // Predicated region
            $region45: #{residual_block_sequence.1} parent=43 // pred_check
              _
            $region46: #{residual_block_sequence.1} parent=43 // pred_check_branch
              %523 = sbr.rel (0) target = $region48
            $region47: #{residual_block_sequence.1} parent=43 // pred_region
              // Predicated region
              $region60: #{residual_block_sequence.1} parent=47 // pred_check
                _
              $region61: #{residual_block_sequence.1} parent=47 // pred_check_branch
                %541 = sbr.rel (0) target = $region63
              $region62: #{residual_block_sequence.1} parent=47 // pred_region
                loop: start=0, step=1, limit=1
                $region64: #{residual_block_sequence.1} parent=62 // loop_pre_header
                  _
                $region65: #{residual_block_sequence.1} parent=62 // loop_header
                  %s543 = sphi 0, %s547
                  %p544 = scmp.ge.s32.totalorder %s543, 1
                  %s548 = sphi %s511, %s511
                  %s549 = sphi %s519, %s519
                $region66: #{residual_block_sequence.1} parent=62 // loop_header_branch
                  %546 = sbr.rel (%p544) target = $region70
                $region67: #{residual_block_sequence.1} parent=62 // loop_body
                  %v550 = vld [vmem:[%s548] sm:$0xff]
                  %551 = vst [vmem:[%s549] sm:$0xff] %v550
                  %v552 = vld [vmem:[%s548 + $0x8] sm:$0xff]
                  %553 = vst [vmem:[%s549 + $0x10] sm:$0xff] %v552
                $region68: #{residual_block_sequence.1} parent=62 // loop_footer
                  %s547 = sadd.s32 1, %s543
                $region69: #{residual_block_sequence.1} parent=62 // loop_footer_branch
                  %542 = sbr.rel target = $region65
                $region70: #{residual_block_sequence.1} parent=62 // loop_exit
                  _
              $region63: #{residual_block_sequence.1} parent=47 // pred_fallthru
                _
              // Predicated region
              $region71: #{residual_block_sequence.1} parent=47 // pred_check
                _
              $region72: #{residual_block_sequence.1} parent=47 // pred_check_branch
                %555 = sbr.rel target = $region74
              $region73: #{residual_block_sequence.1} parent=47 // pred_region
                _
              $region74: #{residual_block_sequence.1} parent=47 // pred_fallthru
                _
            $region48: #{residual_block_sequence.1} parent=43 // pred_fallthru
              _
            // Predicated region
            $region49: #{residual_block_sequence.1} parent=43 // pred_check
              _
            $region50: #{residual_block_sequence.1} parent=43 // pred_check_branch
              %525 = sbr.rel target = $region52
            $region51: #{residual_block_sequence.1} parent=43 // pred_region
              %s527 = ssub.s32 256, 1
              loop: start=0, step=1, limit=1
              $region53: #{residual_block_sequence.1} parent=51 // loop_pre_header
                _
              $region54: #{residual_block_sequence.1} parent=51 // loop_header
                %s529 = sphi 0, %s533
                %p530 = scmp.ge.s32.totalorder %s529, 1
                %s534 = sphi %s511, %s511
                %s535 = sphi %s519, %s519
              $region55: #{residual_block_sequence.1} parent=51 // loop_header_branch
                %532 = sbr.rel (%p530) target = $region59
              $region56: #{residual_block_sequence.1} parent=51 // loop_body
                %v536 = vld [vmem:[%s534] sm:%s527]
                %537 = vst [vmem:[%s535] sm:%s527] %v536
                %v538 = vld [vmem:[%s534 + $0x8] sm:%s527]
                %539 = vst [vmem:[%s535 + $0x10] sm:%s527] %v538
              $region57: #{residual_block_sequence.1} parent=51 // loop_footer
                %s533 = sadd.s32 1, %s529
              $region58: #{residual_block_sequence.1} parent=51 // loop_footer_branch
                %528 = sbr.rel target = $region54
              $region59: #{residual_block_sequence.1} parent=51 // loop_exit
                _
            $region52: #{residual_block_sequence.1} parent=43 // pred_fallthru
              _
          $region44: #{residual_block_sequence.1} parent=39 // pred_fallthru
            _
          %556 = vnop
        $region40: #{residual_block_sequence.1} parent=35 // pred_fallthru
          _
      $region36: #{residual_block_sequence.1} parent=5 // pred_fallthru
        _
      %p557 = scmp.le.s32.totalorder 2, %s10
      // Predicated region
      $region75: #{residual_block_sequence.1} parent=5 // pred_check
        %p558 = pneg %p557
      $region76: #{residual_block_sequence.1} parent=5 // pred_check_branch
        %560 = sbr.rel (%p558) target = $region78
      $region77: #{residual_block_sequence.1} parent=5 // pred_region
        %s561 = ssub.s32 %s10, 2
        // Predicated region
        $region79: #{residual_block_sequence.1} parent=77 // pred_check
          %p562 = pneg %p157
        $region80: #{residual_block_sequence.1} parent=77 // pred_check_branch
          %564 = sbr.rel (%p562) target = $region82
        $region81: #{residual_block_sequence.1} parent=77 // pred_region
          %s565 = sand.u32 %s142, 1
          %s566 = sand.u32 %s142, 1
          %s567 = smul.addr %s566, 16
          %s568 = scalar_lea.vmem [#allocation2], %s567
        $region82: #{residual_block_sequence.1} parent=77 // pred_fallthru
          _
      $region78: #{residual_block_sequence.1} parent=5 // pred_fallthru
        _
    $region6: #{residual_block_sequence.1} parent=1 // loop_footer
      %s14 = sadd.s32 1, %s10
    $region7: #{residual_block_sequence.1} parent=1 // loop_footer_branch
      %9 = sbr.rel target = $region3
    $region8: #{residual_block_sequence.1} parent=1 // loop_exit
      _

</llo_original>
